<compile_context>
chip_gen: v6e
topology: v6e:2x2x1
jax: 0.10.0
libtpu: 0.0.40
codegen_flags: <defaults>
</compile_context>

<pallas_src>
import functools

import jax
import jax.numpy as jnp
from jax.experimental import pallas as pl
from jax.experimental.pallas import tpu as pltpu


def _round_up(n, m):
    return ((n + m - 1) // m) * m


def mlp_kernel(x_ref, w1_ref, b1_ref, w2_ref, b2_ref, w3_ref, b3_ref, o_ref):
    """relu(x@W1+b1) -> relu(.@W2+b2) -> VPU-reduce(. * w3) + b3 for one batch tile."""
    x = x_ref[...]                                   # (TB, 16) bf16
    h1 = jnp.dot(x, w1_ref[...], preferred_element_type=jnp.float32) + b1_ref[...]
    h1 = jnp.maximum(h1, 0.0)                        # f32
    h2 = jnp.dot(h1.astype(w2_ref.dtype), w2_ref[...],
                 preferred_element_type=jnp.float32) + b2_ref[...]
    h2 = jnp.maximum(h2, 0.0)                        # (TB, 32) f32
    # N=1 output layer: a padded 128-lane MXU pass would be >99% waste, so do
    # a VPU elementwise multiply + lane reduction instead.
    o_ref[...] = jnp.sum(h2 * w3_ref[...], axis=-1, keepdims=True) + b3_ref[...]


@functools.partial(jax.jit, static_argnames=("tb_max",))
def simple_nn_forward(x, w1, b1, w2, b2, w3, b3, *, tb_max=1024):
    """Forward pass matching PyTorch SimpleNN (fc1 -> relu -> fc2 -> relu -> fc3).

    Weights are in [in, out] layout (transposed vs. torch); biases are (1, out).
    """
    batch, in_dim = x.shape
    h1_dim = w1.shape[1]
    h2_dim = w2.shape[1]

    # bf16 on the MXU-facing operands (x is the only O(batch) stream -> halves
    # its HBM traffic); accumulation, biases, ReLU and the final VPU layer stay f32.
    x_bf = x.astype(jnp.bfloat16)
    w1_bf = w1.astype(jnp.bfloat16)
    w2_bf = w2.astype(jnp.bfloat16)
    w3_row = w3.reshape(1, h2_dim).astype(jnp.float32)   # (32, 1) -> (1, 32)

    # Batch tile: as large as reasonable (amortize the ~0.35us/step overhead),
    # multiple of 8 sublanes, no bigger than the (padded) batch itself.
    tb = min(tb_max, _round_up(batch, 8))
    num_tiles = pl.cdiv(batch, tb)
    padded = num_tiles * tb
    if padded != batch:
        x_bf = jnp.pad(x_bf, ((0, padded - batch), (0, 0)))

    const = lambda i: (0, 0)   # weights/biases: one VMEM-resident copy for the whole grid
    out = pl.pallas_call(
        mlp_kernel,
        out_shape=jax.ShapeDtypeStruct((padded, 1), jnp.float32),
        grid=(num_tiles,),
        in_specs=[
            pl.BlockSpec((tb, in_dim), lambda i: (i, 0)),      # x tile (pipelined)
            pl.BlockSpec((in_dim, h1_dim), const),             # W1
            pl.BlockSpec((1, h1_dim), const),                  # b1
            pl.BlockSpec((h1_dim, h2_dim), const),             # W2
            pl.BlockSpec((1, h2_dim), const),                  # b2
            pl.BlockSpec((1, h2_dim), const),                  # w3 as a row (VPU layer)
            pl.BlockSpec((1, 1), const),                       # b3
        ],
        out_specs=pl.BlockSpec((tb, 1), lambda i: (i, 0)),
        compiler_params=pltpu.CompilerParams(
            dimension_semantics=("parallel",),                 # megacore on v7x
        ),
    )(x_bf, w1_bf, b1, w2_bf, b2, w3_row, b3)
    return out[:batch]


def init_linear_params(key, fan_in, fan_out):
    """PyTorch-style uniform(-1/sqrt(fan_in), 1/sqrt(fan_in)) init.

    Returns W of shape [fan_in, fan_out] (transposed vs. torch) and b of
    shape [1, fan_out] (2D for a clean TPU lane layout).
    """
    kw, kb = jax.random.split(key)
    bound = 1.0 / jnp.sqrt(jnp.float32(fan_in))
    w = jax.random.uniform(kw, (fan_in, fan_out), jnp.float32, -bound, bound)
    b = jax.random.uniform(kb, (1, fan_out), jnp.float32, -bound, bound)
    return w, b


def _reference(x, w1, b1, w2, b2, w3, b3):
    """Pure-JAX reference with the same bf16-input / f32-accumulate contract."""
    h1 = jnp.dot(x.astype(jnp.bfloat16), w1.astype(jnp.bfloat16),
                 preferred_element_type=jnp.float32) + b1
    h1 = jnp.maximum(h1, 0.0)
    h2 = jnp.dot(h1.astype(jnp.bfloat16), w2.astype(jnp.bfloat16),
                 preferred_element_type=jnp.float32) + b2
    h2 = jnp.maximum(h2, 0.0)
    return jnp.sum(h2 * w3.reshape(1, -1), axis=-1, keepdims=True) + b3


if __name__ == "__main__":
    input_size = 16

    key = jax.random.PRNGKey(0)
    kx, k1, k2, k3, kx2 = jax.random.split(key, 5)

    w1, b1 = init_linear_params(k1, input_size, 64)
    w2, b2 = init_linear_params(k2, 64, 32)
    w3, b3 = init_linear_params(k3, 32, 1)

    # Test 1: small batch (matches the original trainer-style usage).
    batch = 8
    x = jax.random.normal(kx, (batch, input_size), dtype=jnp.float32)
    out = jax.block_until_ready(simple_nn_forward(x, w1, b1, w2, b2, w3, b3))
    ref = _reference(x, w1, b1, w2, b2, w3, b3)
    assert out.shape == (batch, 1)
    assert jnp.allclose(out, ref, atol=1e-4, rtol=1e-4), float(jnp.max(jnp.abs(out - ref)))

    # Test 2: multi-tile grid with a batch that is not a tile multiple
    # (exercises pipelining + padding path; tb_max shrunk so >1 grid step runs).
    batch2 = 300
    x2 = jax.random.normal(kx2, (batch2, input_size), dtype=jnp.float32)
    out2 = jax.block_until_ready(
        simple_nn_forward(x2, w1, b1, w2, b2, w3, b3, tb_max=128))
    ref2 = _reference(x2, w1, b1, w2, b2, w3, b3)
    assert out2.shape == (batch2, 1)
    assert jnp.allclose(out2, ref2, atol=1e-4, rtol=1e-4), float(jnp.max(jnp.abs(out2 - ref2)))

    print("KERNEL_OK")
</pallas_src>

<mosaic_0001>
module attributes {stable_mosaic.version = 11 : i64} {
  func.func @mlp_kernel(%arg0: i32, %arg1: memref<8x16xbf16, #tpu.memory_space<vmem>>, %arg2: memref<16x64xbf16, #tpu.memory_space<vmem>>, %arg3: memref<1x64xf32, #tpu.memory_space<vmem>>, %arg4: memref<64x32xbf16, #tpu.memory_space<vmem>>, %arg5: memref<1x32xf32, #tpu.memory_space<vmem>>, %arg6: memref<1x32xf32, #tpu.memory_space<vmem>>, %arg7: memref<1x1xf32, #tpu.memory_space<vmem>>, %arg8: memref<8x1xf32, #tpu.memory_space<vmem>>) attributes {dimension_semantics = [#tpu.dimension_semantics<parallel>], iteration_bounds = array<i64: 1>, scalar_prefetch = 0 : i64, scratch_operands = 0 : i64, tpu.core_type = #tpu.core_type<tc>, window_params = [{transform_indices = @transform_0, window_bounds = array<i64: 8, 16>}, {pipeline_mode = #tpu.pipeline_mode<synchronous>, transform_indices = @transform_1, window_bounds = array<i64: 16, 64>}, {pipeline_mode = #tpu.pipeline_mode<synchronous>, transform_indices = @transform_2, window_bounds = array<i64: 1, 64>}, {pipeline_mode = #tpu.pipeline_mode<synchronous>, transform_indices = @transform_3, window_bounds = array<i64: 64, 32>}, {pipeline_mode = #tpu.pipeline_mode<synchronous>, transform_indices = @transform_4, window_bounds = array<i64: 1, 32>}, {pipeline_mode = #tpu.pipeline_mode<synchronous>, transform_indices = @transform_5, window_bounds = array<i64: 1, 32>}, {pipeline_mode = #tpu.pipeline_mode<synchronous>, transform_indices = @transform_6, window_bounds = array<i64: 1, 1>}, {transform_indices = @transform_7, window_bounds = array<i64: 8, 1>}]} {
    %c0 = arith.constant 0 : index
    %c0_0 = arith.constant 0 : index
    %0 = vector.load %arg1[%c0, %c0_0] : memref<8x16xbf16, #tpu.memory_space<vmem>>, vector<8x16xbf16>
    %c0_1 = arith.constant 0 : index
    %c0_2 = arith.constant 0 : index
    %1 = vector.load %arg2[%c0_1, %c0_2] : memref<16x64xbf16, #tpu.memory_space<vmem>>, vector<16x64xbf16>
    %cst = arith.constant dense<0.000000e+00> : vector<8x64xf32>
    %2 = tpu.matmul %0, %1, %cst {dimension_numbers = #tpu.dot_dimension_numbers<[1], [0], [0], [1], [0, 0, 1, 1], [], []>} : vector<8x16xbf16>, vector<16x64xbf16>, vector<8x64xf32> -> vector<8x64xf32>
    %c0_3 = arith.constant 0 : index
    %c0_4 = arith.constant 0 : index
    %3 = vector.load %arg3[%c0_3, %c0_4] : memref<1x64xf32, #tpu.memory_space<vmem>>, vector<1x64xf32>
    %4 = vector.broadcast %3 : vector<1x64xf32> to vector<8x64xf32>
    %5 = arith.addf %2, %4 : vector<8x64xf32>
    %cst_5 = arith.constant 0.000000e+00 : f32
    %6 = vector.broadcast %cst_5 : f32 to vector<8x64xf32>
    %7 = arith.maximumf %5, %6 : vector<8x64xf32>
    %8 = arith.truncf %7 : vector<8x64xf32> to vector<8x64xbf16>
    %c0_6 = arith.constant 0 : index
    %c0_7 = arith.constant 0 : index
    %9 = vector.load %arg4[%c0_6, %c0_7] : memref<64x32xbf16, #tpu.memory_space<vmem>>, vector<64x32xbf16>
    %cst_8 = arith.constant dense<0.000000e+00> : vector<8x32xf32>
    %10 = tpu.matmul %8, %9, %cst_8 {dimension_numbers = #tpu.dot_dimension_numbers<[1], [0], [0], [1], [0, 0, 1, 1], [], []>} : vector<8x64xbf16>, vector<64x32xbf16>, vector<8x32xf32> -> vector<8x32xf32>
    %c0_9 = arith.constant 0 : index
    %c0_10 = arith.constant 0 : index
    %11 = vector.load %arg5[%c0_9, %c0_10] : memref<1x32xf32, #tpu.memory_space<vmem>>, vector<1x32xf32>
    %12 = vector.broadcast %11 : vector<1x32xf32> to vector<8x32xf32>
    %13 = arith.addf %10, %12 : vector<8x32xf32>
    %cst_11 = arith.constant 0.000000e+00 : f32
    %14 = vector.broadcast %cst_11 : f32 to vector<8x32xf32>
    %15 = arith.maximumf %13, %14 : vector<8x32xf32>
    %c0_12 = arith.constant 0 : index
    %c0_13 = arith.constant 0 : index
    %16 = vector.load %arg6[%c0_12, %c0_13] : memref<1x32xf32, #tpu.memory_space<vmem>>, vector<1x32xf32>
    %17 = vector.broadcast %16 : vector<1x32xf32> to vector<8x32xf32>
    %18 = arith.mulf %15, %17 : vector<8x32xf32>
    %cst_14 = arith.constant dense<0.000000e+00> : vector<8xf32>
    %19 = vector.multi_reduction <add>, %18, %cst_14 [1] : vector<8x32xf32> to vector<8xf32>
    %20 = vector.shape_cast %19 : vector<8xf32> to vector<8x1xf32>
    %c0_15 = arith.constant 0 : index
    %c0_16 = arith.constant 0 : index
    %21 = vector.load %arg7[%c0_15, %c0_16] : memref<1x1xf32, #tpu.memory_space<vmem>>, vector<1x1xf32>
    %22 = vector.broadcast %21 : vector<1x1xf32> to vector<8x1xf32>
    %23 = arith.addf %20, %22 : vector<8x1xf32>
    %c0_17 = arith.constant 0 : index
    %c0_18 = arith.constant 0 : index
    %24 = vector.load %arg8[%c0_17, %c0_18] : memref<8x1xf32, #tpu.memory_space<vmem>>, vector<8x1xf32>
    tpu.vector_store %arg8[%c0_17, %c0_18], %23 {strides = array<i32>} : memref<8x1xf32, #tpu.memory_space<vmem>>, vector<8x1xf32>,
    return
  }
  func.func @transform_0(%arg0: i32) -> (i32, i32) {
    %c0_i32 = arith.constant 0 : i32
    %c0_i32_0 = arith.constant 0 : i32
    return %arg0, %c0_i32 : i32, i32
  }
  func.func @transform_1(%arg0: i32) -> (i32, i32) {
    %c0_i32 = arith.constant 0 : i32
    %c0_i32_0 = arith.constant 0 : i32
    %c0_i32_1 = arith.constant 0 : i32
    return %c0_i32, %c0_i32_0 : i32, i32
  }
  func.func @transform_2(%arg0: i32) -> (i32, i32) {
    %c0_i32 = arith.constant 0 : i32
    %c0_i32_0 = arith.constant 0 : i32
    %c0_i32_1 = arith.constant 0 : i32
    return %c0_i32, %c0_i32_0 : i32, i32
  }
  func.func @transform_3(%arg0: i32) -> (i32, i32) {
    %c0_i32 = arith.constant 0 : i32
    %c0_i32_0 = arith.constant 0 : i32
    %c0_i32_1 = arith.constant 0 : i32
    return %c0_i32, %c0_i32_0 : i32, i32
  }
  func.func @transform_4(%arg0: i32) -> (i32, i32) {
    %c0_i32 = arith.constant 0 : i32
    %c0_i32_0 = arith.constant 0 : i32
    %c0_i32_1 = arith.constant 0 : i32
    return %c0_i32, %c0_i32_0 : i32, i32
  }
  func.func @transform_5(%arg0: i32) -> (i32, i32) {
    %c0_i32 = arith.constant 0 : i32
    %c0_i32_0 = arith.constant 0 : i32
    %c0_i32_1 = arith.constant 0 : i32
    return %c0_i32, %c0_i32_0 : i32, i32
  }
  func.func @transform_6(%arg0: i32) -> (i32, i32) {
    %c0_i32 = arith.constant 0 : i32
    %c0_i32_0 = arith.constant 0 : i32
    %c0_i32_1 = arith.constant 0 : i32
    return %c0_i32, %c0_i32_0 : i32, i32
  }
  func.func @transform_7(%arg0: i32) -> (i32, i32) {
    %c0_i32 = arith.constant 0 : i32
    %c0_i32_0 = arith.constant 0 : i32
    return %arg0, %c0_i32 : i32, i32
  }
}

</mosaic_0001>

<llo_original>
// kernel: simple_nn_forward.1
$region0: #{simple_nn_forward.1}
  #allocation0 [shape = 'u32[]', space=smem, size = 0x4, offset = 0x4, fixed_abs, tag = 'smem constant byte address 0x4 - core index']
  #allocation1 [shape = 'u32[144,128]{1,0:T(1,128)}', space=vmem, size = 0x12000, scoped, tag = 'internal scratch']
  #allocation2 [shape = 'f32[1,1]{1,0:T(1,128)S(1)}', space=vmem, size = 0x200, scoped, tag = 'scoped memory for simple_nn_forward.1']
  %s0 = inlined_call_operand.vmem [shape: bf16[8,16], index: 0, kind: input, shape index: {}]
  %s1 = inlined_call_operand.vmem [shape: bf16[16,64], index: 1, kind: input, shape index: {}]
  %s2 = inlined_call_operand.vmem [shape: f32[1,64], index: 2, kind: input, shape index: {}]
  %s3 = inlined_call_operand.vmem [shape: bf16[64,32], index: 3, kind: input, shape index: {}]
  %s4 = inlined_call_operand.vmem [shape: f32[1,32], index: 4, kind: input, shape index: {}]
  %s5 = inlined_call_operand.vmem [shape: f32[1,32], index: 5, kind: input, shape index: {}]
  %s6 = inlined_call_operand.<no memory space> [shape: f32[1,1], index: 6, kind: input, shape index: {}]
  %s7 = inlined_call_operand.vmem [shape: f32[8,1], index: 7, kind: output, shape index: {}]
  %s8 = sld [smem:[#allocation0]]
  $region38: #{simple_nn_forward.1} parent=0
    _
  %s10 = ssub.s32 1, %s8
  %s11 = scalar_select 0, %s10, %s8
  %v12 = vstv %s6
  %13 = vst [vmem:[#allocation2] sm:$0x1] %v12
  // Predicated region
  $region2: #{simple_nn_forward.1} parent=0 // pred_check
    _
  $region3: #{simple_nn_forward.1} parent=0 // pred_check_branch
    %15 = sbr.rel (0) target = $region5
  $region4: #{simple_nn_forward.1} parent=0 // pred_region
    _
  $region5: #{simple_nn_forward.1} parent=0 // pred_fallthru
    _
  // Predicated region
  $region6: #{simple_nn_forward.1} parent=0 // pred_check
    _
  $region7: #{simple_nn_forward.1} parent=0 // pred_check_branch
    %17 = sbr.rel (0) target = $region9
  $region8: #{simple_nn_forward.1} parent=0 // pred_region
    _
  $region9: #{simple_nn_forward.1} parent=0 // pred_fallthru
    _
  // Predicated region
  $region10: #{simple_nn_forward.1} parent=0 // pred_check
    _
  $region11: #{simple_nn_forward.1} parent=0 // pred_check_branch
    %19 = sbr.rel (0) target = $region13
  $region12: #{simple_nn_forward.1} parent=0 // pred_region
    _
  $region13: #{simple_nn_forward.1} parent=0 // pred_fallthru
    _
  // Predicated region
  $region14: #{simple_nn_forward.1} parent=0 // pred_check
    _
  $region15: #{simple_nn_forward.1} parent=0 // pred_check_branch
    %21 = sbr.rel (0) target = $region17
  $region16: #{simple_nn_forward.1} parent=0 // pred_region
    _
  $region17: #{simple_nn_forward.1} parent=0 // pred_fallthru
    _
  // Predicated region
  $region18: #{simple_nn_forward.1} parent=0 // pred_check
    _
  $region19: #{simple_nn_forward.1} parent=0 // pred_check_branch
    %23 = sbr.rel (0) target = $region21
  $region20: #{simple_nn_forward.1} parent=0 // pred_region
    _
  $region21: #{simple_nn_forward.1} parent=0 // pred_fallthru
    _
  // Predicated region
  $region22: #{simple_nn_forward.1} parent=0 // pred_check
    _
  $region23: #{simple_nn_forward.1} parent=0 // pred_check_branch
    %25 = sbr.rel (0) target = $region25
  $region24: #{simple_nn_forward.1} parent=0 // pred_region
    _
  $region25: #{simple_nn_forward.1} parent=0 // pred_fallthru
    _
  // Predicated region
  $region26: #{simple_nn_forward.1} parent=0 // pred_check
    _
  $region27: #{simple_nn_forward.1} parent=0 // pred_check_branch
    %27 = sbr.rel (0) target = $region29
  $region28: #{simple_nn_forward.1} parent=0 // pred_region
    _
  $region29: #{simple_nn_forward.1} parent=0 // pred_fallthru
    _
  %v29 = vld [vmem:[%s0] sm:$0xf]
  %v30 = vld [vmem:[%s1] sm:$0xf]
  %v31 = vld [vmem:[%s1 + $0x4] sm:$0xf]
  %v32 = vld [vmem:[%s2] sm:$0x1]
  %v34 = vlaneseq
  %v35 = vshrl.u32 %v34, 7
  %v36 = vsub.s32 0, %v35
  %v37 = vrot.slane %v32, %v36
  %v41 = vunpack.c.l.b16 %v30
  %v42 = vunpack.c.l.b16 %v31
  %v43 = vpack.c.b16 %v42, %v41
  %vm45 = vcmask 130048
  %v47 = vsel %vm45, %v29, 0
  %49 = vmatprep.subr.bf16.mxu0 0
  %50 = vmatpush1.bf16.msra.mxu0 0
  %51 = vmatprep.subr.bf16.mxu0 0
  %52 = vmatpush1.bf16.msra.mxu0 0
  %53 = vmatprep.subr.bf16.mxu0 0
  %54 = vmatpush1.bf16.msra.mxu0 0
  %55 = vmatprep.subr.bf16.mxu0 0
  %56 = vmatpush1.bf16.msra.mxu0 0
  %57 = vmatprep.subr.bf16.mxu0 0
  %58 = vmatpush1.bf16.msra.mxu0 0
  %59 = vmatprep.subr.bf16.mxu0 0
  %60 = vmatpush1.bf16.msra.mxu0 0
  %61 = vmatprep.subr.bf16.mxu0 0
  %62 = vmatpush1.bf16.msra.mxu0 0
  %63 = vmatprep.subr.bf16.mxu0 0
  %64 = vmatpush1.bf16.msra.mxu0 %v43
  %65 = vmatprep.subr.bf16.mxu0 0
  %66 = vmatpush2.bf16.msra.mxu0 0
  %67 = vmatprep.subr.bf16.mxu0 0
  %68 = vmatpush2.bf16.msra.mxu0 0
  %69 = vmatprep.subr.bf16.mxu0 0
  %70 = vmatpush2.bf16.msra.mxu0 0
  %71 = vmatprep.subr.bf16.mxu0 0
  %72 = vmatpush2.bf16.msra.mxu0 0
  %73 = vmatprep.subr.bf16.mxu0 0
  %74 = vmatpush2.bf16.msra.mxu0 0
  %75 = vmatprep.subr.bf16.mxu0 0
  %76 = vmatpush2.bf16.msra.mxu0 0
  %77 = vmatprep.subr.bf16.mxu0 0
  %78 = vmatpush2.bf16.msra.mxu0 0
  %79 = vmatprep.subr.bf16.mxu0 0
  %80 = vmatpush2.bf16.msra.mxu0 0
  %81 = vmatprep.mubr.bf16.mxu0 0
  %82 = vmatmul.mubr.bf16.gmra.mxu0 %v47
  %v83 = vpop.f32.mrf.mxu0
  %v84 = vadd.f32 %v37, %v83
  %v85 = vpop.f32.mrf.mxu0
  %v86 = vpop.f32.mrf.mxu0
  %v87 = vpop.f32.mrf.mxu0
  %88 = vdwg.mxu0
  %v89 = vmax.f32 %v84, 0.0
  %v90 = vpack.c.bf16 %v89, %v89
  %v91 = vld [vmem:[%s3] sm:$0xf]
  %v92 = vld [vmem:[%s3 + $0x4] sm:$0xf]
  %v93 = vld [vmem:[%s3 + $0x8] sm:$0xf]
  %v94 = vld [vmem:[%s3 + $0xc] sm:$0xf]
  %v95 = vld [vmem:[%s3 + $0x10] sm:$0xf]
  %v96 = vld [vmem:[%s3 + $0x14] sm:$0xf]
  %v97 = vld [vmem:[%s3 + $0x18] sm:$0xf]
  %v98 = vld [vmem:[%s3 + $0x1c] sm:$0xf]
  %v99 = vld [vmem:[%s4] sm:$0x1]
  %v101 = vlaneseq
  %v102 = vshrl.u32 %v101, 7
  %v103 = vsub.s32 0, %v102
  %v104 = vrot.slane %v99, %v103
  %v114 = vunpack.c.l.b16 %v91
  %v115 = vunpack.c.l.b16 %v92
  %v116 = vunpack.c.l.b16 %v93
  %v117 = vunpack.c.l.b16 %v94
  %v118 = vunpack.c.l.b16 %v95
  %v119 = vunpack.c.l.b16 %v96
  %v120 = vunpack.c.l.b16 %v97
  %v121 = vunpack.c.l.b16 %v98
  %v122 = vpack.c.b16 %v115, %v114
  %v123 = vpack.c.b16 %v117, %v116
  %v124 = vpack.c.b16 %v119, %v118
  %v125 = vpack.c.b16 %v121, %v120
  %vm130 = vcmask 523264
  %v132 = vsel %vm130, %v90, 0
  %134 = vmatprep.subr.bf16.mxu0 0
  %135 = vmatpush1.bf16.msra.mxu0 0
  %136 = vmatprep.subr.bf16.mxu0 0
  %137 = vmatpush1.bf16.msra.mxu0 0
  %138 = vmatprep.subr.bf16.mxu0 0
  %139 = vmatpush1.bf16.msra.mxu0 0
  %140 = vmatprep.subr.bf16.mxu0 0
  %141 = vmatpush1.bf16.msra.mxu0 0
  %142 = vmatprep.subr.bf16.mxu0 0
  %143 = vmatpush1.bf16.msra.mxu0 %v125
  %144 = vmatprep.subr.bf16.mxu0 0
  %145 = vmatpush1.bf16.msra.mxu0 %v124
  %146 = vmatprep.subr.bf16.mxu0 0
  %147 = vmatpush1.bf16.msra.mxu0 %v123
  %148 = vmatprep.subr.bf16.mxu0 0
  %149 = vmatpush1.bf16.msra.mxu0 %v122
  %150 = vmatprep.subr.bf16.mxu0 0
  %151 = vmatpush2.bf16.msra.mxu0 0
  %152 = vmatprep.subr.bf16.mxu0 0
  %153 = vmatpush2.bf16.msra.mxu0 0
  %154 = vmatprep.subr.bf16.mxu0 0
  %155 = vmatpush2.bf16.msra.mxu0 0
  %156 = vmatprep.subr.bf16.mxu0 0
  %157 = vmatpush2.bf16.msra.mxu0 0
  %158 = vmatprep.subr.bf16.mxu0 0
  %159 = vmatpush2.bf16.msra.mxu0 0
  %160 = vmatprep.subr.bf16.mxu0 0
  %161 = vmatpush2.bf16.msra.mxu0 0
  %162 = vmatprep.subr.bf16.mxu0 0
  %163 = vmatpush2.bf16.msra.mxu0 0
  %164 = vmatprep.subr.bf16.mxu0 0
  %165 = vmatpush2.bf16.msra.mxu0 0
  %166 = vmatprep.mubr.bf16.mxu0 0
  %167 = vmatmul.mubr.bf16.gmra.mxu0 %v132
  %v168 = vpop.f32.mrf.mxu0
  %v169 = vadd.f32 %v104, %v168
  %v170 = vpop.f32.mrf.mxu0
  %v171 = vpop.f32.mrf.mxu0
  %v172 = vpop.f32.mrf.mxu0
  %173 = vdwg.mxu0
  %v174 = vmax.f32 %v169, 0.0
  %v175 = vld [vmem:[%s5] sm:$0x1]
  %v177 = vlaneseq
  %v178 = vshrl.u32 %v177, 7
  %v179 = vsub.s32 0, %v178
  %v180 = vrot.slane %v175, %v179
  %v182 = vmul.f32 %v174, %v180
  %vm183 = vcmask 261120
  %v184 = vsel %vm183, %v182, 0.0
  %185 = vadd.xlane.f32.xlu0 %v184
  %v186 = vpop.xlane.xlu0 %185
  %v187 = vld [vmem:[#allocation2] sm:$0x1]
  %v189 = vlaneseq
  %v190 = vshrl.u32 %v189, 7
  %v191 = vsub.s32 0, %v190
  %v192 = vrot.slane %v187, %v191
  %v194 = vadd.f32 %v186, %v192
  %vm195 = vcmask 7168
  %196 = vst.msk [vmem:[%s7] sm:$0xff] %vm195, %v194
  // Predicated region
  $region30: #{simple_nn_forward.1} parent=0 // pred_check
    _
  $region31: #{simple_nn_forward.1} parent=0 // pred_check_branch
    %198 = sbr.rel (0) target = $region33
  $region32: #{simple_nn_forward.1} parent=0 // pred_region
    _
  $region33: #{simple_nn_forward.1} parent=0 // pred_fallthru
    _
  // Predicated region
  $region34: #{simple_nn_forward.1} parent=0 // pred_check
    _
  $region35: #{simple_nn_forward.1} parent=0 // pred_check_branch
    %200 = sbr.rel (0) target = $region37
  $region36: #{simple_nn_forward.1} parent=0 // pred_region
    _
  $region37: #{simple_nn_forward.1} parent=0 // pred_fallthru
    _

</llo_original>
